<compile_context>
chip_gen: v6e
topology: v6e:2x2x1
jax: 0.10.0
libtpu: 0.0.40
codegen_flags: <defaults>
</compile_context>

<pallas_src>
import functools

import jax
import jax.numpy as jnp
from jax.experimental import pallas as pl
from jax.experimental.pallas import tpu as pltpu


def _round_down(v, m):
    return (v // m) * m


def _round_up(v, m):
    return ((v + m - 1) // m) * m


def _seg_sum(v, seg_bf16):
    """Segment sum (+ broadcast back onto every lane of the segment) of f32 `v`.

    seg_bf16[i, j] == 1 iff lanes i and j belong to the same folded row, so the
    matmul both reduces each C-lane segment and replicates the result, keeping
    everything lane-dense.  Split precision: v = hi + lo (hi = bf16(v),
    lo = bf16(v - hi)); each part is a single-pass bf16 MXU matmul with f32
    accumulation, so the recombined sum is accurate to ~2^-17 relative while
    the MXU work stays far below the tile's HBM DMA time on all generations.
    """
    hi = v.astype(jnp.bfloat16)
    lo = (v - hi.astype(jnp.float32)).astype(jnp.bfloat16)
    s = jnp.dot(hi, seg_bf16, preferred_element_type=jnp.float32)
    s = s + jnp.dot(lo, seg_bf16, preferred_element_type=jnp.float32)
    return s


def _ln_kernel(*refs, bias_free: bool, use_seg: bool, inv_c: float):
    """Row-wise LayerNorm; rows may be lane-folded (g rows per 128-lane row).

    refs layout: x_ref, [seg_ref], w_ref, [b_ref], o_ref
      x_ref  : (TM, Cw)  activations (Cw = g*C; lane-dense when folded)
      seg_ref: (Cw, Cw)  0/1 segment matrix, bf16 (only when use_seg)
      w_ref  : (1, Cw)   f32 weight, tiled g times
      b_ref  : (1, Cw)   f32 bias, tiled g times (WithBias only)
      o_ref  : (TM, Cw)
    """
    it = iter(refs)
    x_ref = next(it)
    seg_ref = next(it) if use_seg else None
    w_ref = next(it)
    b_ref = None if bias_free else next(it)
    o_ref = next(it)

    x = x_ref[...].astype(jnp.float32)
    w = w_ref[...]                              # (1, Cw), float32

    # Two-pass statistics: mu first, then variance of the centered values
    # (avoids catastrophic cancellation of E[x^2] - mu^2).
    if use_seg:
        seg = seg_ref[...]                      # bf16 0/1 (exact)
        mu = _seg_sum(x, seg) * inv_c           # (TM, Cw), replicated per segment
        d = x - mu
        var = _seg_sum(d * d, seg) * inv_c
    else:
        mu = jnp.sum(x, axis=-1, keepdims=True) * inv_c
        d = x - mu
        var = jnp.sum(d * d, axis=-1, keepdims=True) * inv_c

    inv = jax.lax.rsqrt(var + 1e-5)             # EUP op, effectively free here

    if bias_free:
        # BiasFree_LayerNorm: x / sqrt(var + eps) * weight   (no mean subtract,
        # but the variance itself is mean-centered, matching torch.var).
        out = x * (inv * w)
    else:
        # WithBias_LayerNorm: (x - mu) / sqrt(var + eps) * weight + bias
        out = d * (inv * w) + b_ref[...]

    o_ref[...] = out.astype(o_ref.dtype)


def layernorm_without_shape(x, weight, bias=None, *, layernorm_type="WithBias",
                            target_tile_bytes=4 << 20):
    """JAX/Pallas equivalent of LayerNorm_Without_Shape.forward.

    x: (..., C); normalization over the last axis.  weight: (C,) float32;
    bias: (C,) float32 (ignored for 'BiasFree').  The `h, w = x.shape[-2:]`
    read in the PyTorch forward is unused, so it is not reproduced.
    """
    bias_free = (layernorm_type == "BiasFree")
    orig_shape = x.shape
    C = orig_shape[-1]
    R = 1
    for d in orig_shape[:-1]:
        R *= d

    # Lane-fold g rows of width C into one 128-wide lane-dense row whenever C
    # divides 128.  Folding is unconditional: if R is not a multiple of g we
    # pad <= g-1 zero rows (negligible traffic) and slice them back off, rather
    # than falling back to 75%-masked narrow stores.
    g = 1
    if C < 128 and 128 % C == 0:
        g = 128 // C
    Rpad = _round_up(max(R, 1), g)
    x_rows = x.reshape(R, C)
    if Rpad != R:
        x_rows = jnp.pad(x_rows, ((0, Rpad - R), (0, 0)))
    Cw = g * C
    Rf = Rpad // g
    x2d = x_rows.reshape(Rf, Cw)

    itemsize = jnp.dtype(x.dtype).itemsize
    pack = max(8, 32 // itemsize)               # sublane packing: 8 f32 / 16 bf16
    lane_w = _round_up(Cw, 128)                 # lane-padded width

    # Generation-aware VMEM ceiling: 3/4 of per-core VMEM, never above 96 MiB
    # (v5e/v6e: 128 MiB -> 96; v7x: 64 MiB -> 48).  Fallback is v7x-safe.
    try:
        vmem_cap = int(pltpu.get_tpu_info().vmem_capacity_bytes)
    except Exception:
        vmem_cap = 64 << 20
    vmem_cap = max(vmem_cap, 64 << 20)
    vmem_ceiling = min((vmem_cap * 3) // 4, 96 << 20)

    def vmem_needed(rows):
        tile_io = rows * lane_w * itemsize              # one x tile == one out tile
        temps = 6 * rows * lane_w * 4                   # f32 temporaries in the body
        return 4 * tile_io + temps + (2 << 20)          # 2x in + 2x out double-buffered

    # ~4 MiB row tiles hide the ~0.35 us per-grid-step overhead even at v7x
    # HBM bandwidth; shrink only if the estimated VMEM footprint would not fit
    # under this generation's ceiling.
    tm = max(pack, _round_down(target_tile_bytes // (lane_w * itemsize), pack))
    while tm > pack and vmem_needed(tm) > vmem_ceiling:
        tm = max(pack, _round_down(tm // 2, pack))

    if Rf >= 4 * pack:
        # Guarantee >= 2 grid steps so the "parallel" axis can shard across
        # both v7x TensorCores, and rebalance so the last step is not tiny.
        steps = max(2, pl.cdiv(Rf, tm))
        tm = min(tm, _round_up(pl.cdiv(Rf, steps), pack))
    else:
        tm = Rf                                  # one full-extent block (always legal)
    grid = pl.cdiv(Rf, tm)                       # last block may be partial -> masked

    w2d = jnp.tile(weight.astype(jnp.float32).reshape(-1), g).reshape(1, Cw)

    operands = [x2d]
    # NOTE: if an xprof trace ever shows exposed input DMA on v7x, switch this
    # spec to pl.BlockSpec((tm, Cw), lambda i: (i, 0), pipeline_mode=pl.Buffered(3)).
    in_specs = [pl.BlockSpec((tm, Cw), lambda i: (i, 0))]

    use_seg = g > 1
    if use_seg:
        lane = jnp.arange(Cw, dtype=jnp.int32)
        seg = (lane[:, None] // C == lane[None, :] // C).astype(jnp.bfloat16)
        operands.append(seg)
        in_specs.append(pl.BlockSpec((Cw, Cw), lambda i: (0, 0)))

    operands.append(w2d)
    in_specs.append(pl.BlockSpec((1, Cw), lambda i: (0, 0)))

    if not bias_free:
        if bias is None:
            bias = jnp.zeros((C,), dtype=jnp.float32)
        b2d = jnp.tile(bias.astype(jnp.float32).reshape(-1), g).reshape(1, Cw)
        operands.append(b2d)
        in_specs.append(pl.BlockSpec((1, Cw), lambda i: (0, 0)))

    kernel = functools.partial(_ln_kernel, bias_free=bias_free,
                               use_seg=use_seg, inv_c=1.0 / C)

    out = pl.pallas_call(
        kernel,
        out_shape=jax.ShapeDtypeStruct((Rf, Cw), x.dtype),
        grid_spec=pltpu.PrefetchScalarGridSpec(
            num_scalar_prefetch=0,
            grid=(grid,),
            in_specs=in_specs,
            out_specs=pl.BlockSpec((tm, Cw), lambda i: (i, 0)),
        ),
        compiler_params=pltpu.CompilerParams(
            dimension_semantics=("parallel",),
            vmem_limit_bytes=int(vmem_ceiling)),
    )(*operands)

    out = out.reshape(Rpad, C)
    if Rpad != R:
        out = out[:R]
    return out.reshape(orig_shape)


def _reference(x, weight, bias, layernorm_type):
    x32 = x.astype(jnp.float32)
    mu = jnp.mean(x32, axis=-1, keepdims=True)
    var = jnp.mean((x32 - mu) ** 2, axis=-1, keepdims=True)
    if layernorm_type == "BiasFree":
        return (x32 / jnp.sqrt(var + 1e-5) * weight).astype(x.dtype)
    return ((x32 - mu) / jnp.sqrt(var + 1e-5) * weight + bias).astype(x.dtype)


if __name__ == "__main__":
    key = jax.random.PRNGKey(0)
    k1, k2, k3, k4, k5 = jax.random.split(key, 5)

    # Module construction: LayerNorm_Without_Shape(dim=32, 'WithBias') /
    # parameter init matches nn.Parameter(torch.ones / torch.zeros).
    dim = 32
    weight = jnp.ones((dim,), dtype=jnp.float32)
    bias = jnp.zeros((dim,), dtype=jnp.float32)

    # Tokens (B, N, C): last two dims exist so the unused `h, w = x.shape[-2:]`
    # read in the PyTorch forward is well-defined.
    x = jax.random.normal(k1, (2, 8, dim), dtype=jnp.float32)

    out_wb = jax.block_until_ready(
        layernorm_without_shape(x, weight, bias, layernorm_type="WithBias"))
    ref_wb = _reference(x, weight, bias, "WithBias")
    assert jnp.allclose(out_wb, ref_wb, atol=1e-4, rtol=1e-5), "WithBias mismatch"

    out_bf = jax.block_until_ready(
        layernorm_without_shape(x, weight, None, layernorm_type="BiasFree"))
    ref_bf = _reference(x, weight, bias, "BiasFree")
    assert jnp.allclose(out_bf, ref_bf, atol=1e-4, rtol=1e-5), "BiasFree mismatch"

    # Non-trivial params + a row count that needs zero-row padding before the
    # (now unconditional) lane-fold.
    w2 = 0.5 + jax.random.uniform(k2, (dim,), dtype=jnp.float32)
    b2 = 0.1 * jax.random.normal(k3, (dim,), dtype=jnp.float32)
    x2 = jax.random.normal(k4, (1, 7, dim), dtype=jnp.float32)
    out2 = jax.block_until_ready(
        layernorm_without_shape(x2, w2, b2, layernorm_type="WithBias"))
    assert jnp.allclose(out2, _reference(x2, w2, b2, "WithBias"),
                        atol=1e-4, rtol=1e-5), "row-padding path mismatch"

    # Larger (still small) shape exercising the multi-step balanced grid
    # (Rf >= 4*pack -> grid >= 2, partial/balanced blocks).
    x3 = 0.5 + jax.random.normal(k5, (2, 4, 40, dim), dtype=jnp.float32)
    out3 = jax.block_until_ready(
        layernorm_without_shape(x3, w2, b2, layernorm_type="WithBias"))
    assert jnp.allclose(out3, _reference(x3, w2, b2, "WithBias"),
                        atol=1e-4, rtol=1e-5), "multi-block path mismatch"

    print("KERNEL_OK")
</pallas_src>

<mosaic_0001>
module attributes {stable_mosaic.version = 11 : i64} {
  func.func @_ln_kernel(%arg0: i32, %arg1: memref<4x128xf32, #tpu.memory_space<vmem>>, %arg2: memref<128x128xbf16, #tpu.memory_space<vmem>>, %arg3: memref<1x128xf32, #tpu.memory_space<vmem>>, %arg4: memref<1x128xf32, #tpu.memory_space<vmem>>, %arg5: memref<4x128xf32, #tpu.memory_space<vmem>>) attributes {dimension_semantics = [#tpu.dimension_semantics<parallel>], iteration_bounds = array<i64: 1>, scalar_prefetch = 0 : i64, scratch_operands = 0 : i64, tpu.core_type = #tpu.core_type<tc>, window_params = [{transform_indices = @transform_0, window_bounds = array<i64: 4, 128>}, {pipeline_mode = #tpu.pipeline_mode<synchronous>, transform_indices = @transform_1, window_bounds = array<i64: 128, 128>}, {pipeline_mode = #tpu.pipeline_mode<synchronous>, transform_indices = @transform_2, window_bounds = array<i64: 1, 128>}, {pipeline_mode = #tpu.pipeline_mode<synchronous>, transform_indices = @transform_3, window_bounds = array<i64: 1, 128>}, {transform_indices = @transform_4, window_bounds = array<i64: 4, 128>}]} {
    %c0 = arith.constant 0 : index
    %c0_0 = arith.constant 0 : index
    %0 = vector.load %arg1[%c0, %c0_0] : memref<4x128xf32, #tpu.memory_space<vmem>>, vector<4x128xf32>
    %c0_1 = arith.constant 0 : index
    %c0_2 = arith.constant 0 : index
    %1 = vector.load %arg3[%c0_1, %c0_2] : memref<1x128xf32, #tpu.memory_space<vmem>>, vector<1x128xf32>
    %c0_3 = arith.constant 0 : index
    %c0_4 = arith.constant 0 : index
    %2 = vector.load %arg2[%c0_3, %c0_4] : memref<128x128xbf16, #tpu.memory_space<vmem>>, vector<128x128xbf16>
    %3 = arith.truncf %0 : vector<4x128xf32> to vector<4x128xbf16>
    %4 = arith.extf %3 : vector<4x128xbf16> to vector<4x128xf32>
    %5 = arith.subf %0, %4 : vector<4x128xf32>
    %6 = arith.truncf %5 : vector<4x128xf32> to vector<4x128xbf16>
    %cst = arith.constant dense<0.000000e+00> : vector<4x128xf32>
    %7 = tpu.matmul %3, %2, %cst {dimension_numbers = #tpu.dot_dimension_numbers<[1], [0], [0], [1], [0, 0, 1, 1], [], []>} : vector<4x128xbf16>, vector<128x128xbf16>, vector<4x128xf32> -> vector<4x128xf32>
    %cst_5 = arith.constant dense<0.000000e+00> : vector<4x128xf32>
    %8 = tpu.matmul %6, %2, %cst_5 {dimension_numbers = #tpu.dot_dimension_numbers<[1], [0], [0], [1], [0, 0, 1, 1], [], []>} : vector<4x128xbf16>, vector<128x128xbf16>, vector<4x128xf32> -> vector<4x128xf32>
    %9 = arith.addf %7, %8 : vector<4x128xf32>
    %cst_6 = arith.constant 3.125000e-02 : f32
    %10 = vector.broadcast %cst_6 : f32 to vector<4x128xf32>
    %11 = arith.mulf %9, %10 : vector<4x128xf32>
    %12 = arith.subf %0, %11 : vector<4x128xf32>
    %13 = arith.mulf %12, %12 : vector<4x128xf32>
    %14 = arith.truncf %13 : vector<4x128xf32> to vector<4x128xbf16>
    %15 = arith.extf %14 : vector<4x128xbf16> to vector<4x128xf32>
    %16 = arith.subf %13, %15 : vector<4x128xf32>
    %17 = arith.truncf %16 : vector<4x128xf32> to vector<4x128xbf16>
    %cst_7 = arith.constant dense<0.000000e+00> : vector<4x128xf32>
    %18 = tpu.matmul %14, %2, %cst_7 {dimension_numbers = #tpu.dot_dimension_numbers<[1], [0], [0], [1], [0, 0, 1, 1], [], []>} : vector<4x128xbf16>, vector<128x128xbf16>, vector<4x128xf32> -> vector<4x128xf32>
    %cst_8 = arith.constant dense<0.000000e+00> : vector<4x128xf32>
    %19 = tpu.matmul %17, %2, %cst_8 {dimension_numbers = #tpu.dot_dimension_numbers<[1], [0], [0], [1], [0, 0, 1, 1], [], []>} : vector<4x128xbf16>, vector<128x128xbf16>, vector<4x128xf32> -> vector<4x128xf32>
    %20 = arith.addf %18, %19 : vector<4x128xf32>
    %cst_9 = arith.constant 3.125000e-02 : f32
    %21 = vector.broadcast %cst_9 : f32 to vector<4x128xf32>
    %22 = arith.mulf %20, %21 : vector<4x128xf32>
    %cst_10 = arith.constant 9.99999974E-6 : f32
    %23 = vector.broadcast %cst_10 : f32 to vector<4x128xf32>
    %24 = arith.addf %22, %23 : vector<4x128xf32>
    %25 = math.rsqrt %24 : vector<4x128xf32>
    %26 = vector.broadcast %1 : vector<1x128xf32> to vector<4x128xf32>
    %27 = arith.mulf %25, %26 : vector<4x128xf32>
    %28 = arith.mulf %12, %27 : vector<4x128xf32>
    %c0_11 = arith.constant 0 : index
    %c0_12 = arith.constant 0 : index
    %29 = vector.load %arg4[%c0_11, %c0_12] : memref<1x128xf32, #tpu.memory_space<vmem>>, vector<1x128xf32>
    %30 = vector.broadcast %29 : vector<1x128xf32> to vector<4x128xf32>
    %31 = arith.addf %28, %30 : vector<4x128xf32>
    %c0_13 = arith.constant 0 : index
    %c0_14 = arith.constant 0 : index
    %32 = vector.load %arg5[%c0_13, %c0_14] : memref<4x128xf32, #tpu.memory_space<vmem>>, vector<4x128xf32>
    tpu.vector_store %arg5[%c0_13, %c0_14], %31 {strides = array<i32>} : memref<4x128xf32, #tpu.memory_space<vmem>>, vector<4x128xf32>,
    return
  }
  func.func @transform_0(%arg0: i32) -> (i32, i32) {
    %c0_i32 = arith.constant 0 : i32
    %c0_i32_0 = arith.constant 0 : i32
    return %arg0, %c0_i32 : i32, i32
  }
  func.func @transform_1(%arg0: i32) -> (i32, i32) {
    %c0_i32 = arith.constant 0 : i32
    %c0_i32_0 = arith.constant 0 : i32
    %c0_i32_1 = arith.constant 0 : i32
    return %c0_i32, %c0_i32_0 : i32, i32
  }
  func.func @transform_2(%arg0: i32) -> (i32, i32) {
    %c0_i32 = arith.constant 0 : i32
    %c0_i32_0 = arith.constant 0 : i32
    %c0_i32_1 = arith.constant 0 : i32
    return %c0_i32, %c0_i32_0 : i32, i32
  }
  func.func @transform_3(%arg0: i32) -> (i32, i32) {
    %c0_i32 = arith.constant 0 : i32
    %c0_i32_0 = arith.constant 0 : i32
    %c0_i32_1 = arith.constant 0 : i32
    return %c0_i32, %c0_i32_0 : i32, i32
  }
  func.func @transform_4(%arg0: i32) -> (i32, i32) {
    %c0_i32 = arith.constant 0 : i32
    %c0_i32_0 = arith.constant 0 : i32
    return %arg0, %c0_i32 : i32, i32
  }
}

</mosaic_0001>

<llo_original>
// kernel: tpu_custom_call.1
$region0: #{tpu_custom_call.1}
  #allocation0 [shape = 'u32[]', space=smem, size = 0x4, offset = 0x4, fixed_abs, tag = 'smem constant byte address 0x4 - core index']
  #allocation1 [shape = 'u32[144,128]{1,0:T(1,128)}', space=vmem, size = 0x12000, scoped, tag = 'internal scratch']
  %s0 = inlined_call_operand.hbm [shape: f32[4,128], index: 0, kind: input, shape index: {}]
  %s1 = inlined_call_operand.hbm [shape: bf16[128,128], index: 1, kind: input, shape index: {}]
  %s2 = inlined_call_operand.vmem [shape: f32[1,128], index: 2, kind: input, shape index: {}]
  %s3 = inlined_call_operand.vmem [shape: f32[1,128], index: 3, kind: input, shape index: {}]
  %s4 = inlined_call_operand.hbm [shape: f32[4,128], index: 4, kind: output, shape index: {}]
  %s5 = sld [smem:[#allocation0]]
  $region34: #{tpu_custom_call.1} parent=0
    _
  %s7 = ssub.s32 1, %s5
  %s8 = scalar_select 0, %s7, %s5
  $region1: #{tpu_custom_call.1} parent=0
    #allocation2 [shape = 'u8[2048]{0}', space=vmem, size = 0x800, scoped, tag = 'input window, operand 0, single buffered']
    #allocation3 [shape = 's32[1]{0}', space=sflag, size = 0x4, scoped, tag = 'scoped memory for tpu_custom_call.1']
    #allocation4 [shape = 's32[1]{0}', space=sflag, size = 0x4, scoped, tag = 'scoped memory for tpu_custom_call.1']
    #allocation5 [shape = 'u8[32768]{0}', space=vmem, size = 0x8000, scoped, tag = 'input window, operand 1, single buffered']
    #allocation6 [shape = 's32[1]{0}', space=sflag, size = 0x4, scoped, tag = 'scoped memory for tpu_custom_call.1']
    #allocation7 [shape = 'u8[2048]{0}', space=vmem, size = 0x800, scoped, tag = 'output window, operand 0, single buffered']
    %9 = vsyncpa [#allocation3], 0
    %10 = vsyncpa [#allocation6], 0
    %11 = vsyncpa [#allocation4], 0
    // Predicated region
    $region2: #{tpu_custom_call.1} parent=1 // pred_check
      _
    $region3: #{tpu_custom_call.1} parent=1 // pred_check_branch
      %13 = sbr.rel (0) target = $region5
    $region4: #{tpu_custom_call.1} parent=1 // pred_region
      %s15 = ssub.s32 64, 64
      %16 = vsyncadd [#allocation3], %s15
      %s18 = sshll.u32 [#allocation2], 4
      %s19 = int_to_ptr.vmem [resolvable:$true] %s18
      %21 = dma.hbm_to_vmem [thread:$0]  %s0, 64, %s19, [#allocation3]
    $region5: #{tpu_custom_call.1} parent=1 // pred_fallthru
      _
    // Predicated region
    $region6: #{tpu_custom_call.1} parent=1 // pred_check
      _
    $region7: #{tpu_custom_call.1} parent=1 // pred_check_branch
      %23 = sbr.rel (0) target = $region9
    $region8: #{tpu_custom_call.1} parent=1 // pred_region
      %s25 = ssub.s32 1024, 1024
      %26 = vsyncadd [#allocation6], %s25
      %s27 = sshll.u32 [#allocation5], 4
      %s28 = int_to_ptr.vmem [resolvable:$true] %s27
      %33 = dma.hbm_to_vmem [thread:$0]  %s1, 1024, %s28, [#allocation6], 64, 64, 4
    $region9: #{tpu_custom_call.1} parent=1 // pred_fallthru
      _
    // Predicated region
    $region10: #{tpu_custom_call.1} parent=1 // pred_check
      _
    $region11: #{tpu_custom_call.1} parent=1 // pred_check_branch
      %35 = sbr.rel (0) target = $region13
    $region12: #{tpu_custom_call.1} parent=1 // pred_region
      _
    $region13: #{tpu_custom_call.1} parent=1 // pred_fallthru
      _
    // Predicated region
    $region14: #{tpu_custom_call.1} parent=1 // pred_check
      _
    $region15: #{tpu_custom_call.1} parent=1 // pred_check_branch
      %37 = sbr.rel (0) target = $region17
    $region16: #{tpu_custom_call.1} parent=1 // pred_region
      _
    $region17: #{tpu_custom_call.1} parent=1 // pred_fallthru
      _
    // Predicated region
    $region18: #{tpu_custom_call.1} parent=1 // pred_check
      _
    $region19: #{tpu_custom_call.1} parent=1 // pred_check_branch
      %39 = sbr.rel (0) target = $region21
    $region20: #{tpu_custom_call.1} parent=1 // pred_region
      %40 = dma.done [#allocation3], 64
    $region21: #{tpu_custom_call.1} parent=1 // pred_fallthru
      _
    // Predicated region
    $region22: #{tpu_custom_call.1} parent=1 // pred_check
      _
    $region23: #{tpu_custom_call.1} parent=1 // pred_check_branch
      %42 = sbr.rel (0) target = $region25
    $region24: #{tpu_custom_call.1} parent=1 // pred_region
      %43 = dma.done [#allocation6], 1024
    $region25: #{tpu_custom_call.1} parent=1 // pred_fallthru
      _
    %v45 = vld [vmem:[#allocation2] sm:$0xf]
    %v46 = vld [vmem:[%s2] sm:$0x1]
    %v47 = vld [vmem:[#allocation5] sm:$0xf]
    %v48 = vld [vmem:[#allocation5 + $0x4] sm:$0xf]
    %v49 = vld [vmem:[#allocation5 + $0x8] sm:$0xf]
    %v50 = vld [vmem:[#allocation5 + $0xc] sm:$0xf]
    %v51 = vld [vmem:[#allocation5 + $0x10] sm:$0xf]
    %v52 = vld [vmem:[#allocation5 + $0x14] sm:$0xf]
    %v53 = vld [vmem:[#allocation5 + $0x18] sm:$0xf]
    %v54 = vld [vmem:[#allocation5 + $0x1c] sm:$0xf]
    %v55 = vld [vmem:[#allocation5 + $0x20] sm:$0xf]
    %v56 = vld [vmem:[#allocation5 + $0x24] sm:$0xf]
    %v57 = vld [vmem:[#allocation5 + $0x28] sm:$0xf]
    %v58 = vld [vmem:[#allocation5 + $0x2c] sm:$0xf]
    %v59 = vld [vmem:[#allocation5 + $0x30] sm:$0xf]
    %v60 = vld [vmem:[#allocation5 + $0x34] sm:$0xf]
    %v61 = vld [vmem:[#allocation5 + $0x38] sm:$0xf]
    %v62 = vld [vmem:[#allocation5 + $0x3c] sm:$0xf]
    %v63 = vpack.c.bf16 %v45, %v45
    %v64 = vunpack.c.l.bf16 %v63
    %v65 = vsub.f32 %v45, %v64
    %v66 = vpack.c.bf16 %v65, %v65
    %v83 = vunpack.c.l.b16 %v47
    %v84 = vunpack.c.l.b16 %v48
    %v85 = vunpack.c.l.b16 %v49
    %v86 = vunpack.c.l.b16 %v50
    %v87 = vunpack.c.l.b16 %v51
    %v88 = vunpack.c.l.b16 %v52
    %v89 = vunpack.c.l.b16 %v53
    %v90 = vunpack.c.l.b16 %v54
    %v91 = vunpack.c.l.b16 %v55
    %v92 = vunpack.c.l.b16 %v56
    %v93 = vunpack.c.l.b16 %v57
    %v94 = vunpack.c.l.b16 %v58
    %v95 = vunpack.c.l.b16 %v59
    %v96 = vunpack.c.l.b16 %v60
    %v97 = vunpack.c.l.b16 %v61
    %v98 = vunpack.c.l.b16 %v62
    %v99 = vpack.c.b16 %v84, %v83
    %v100 = vpack.c.b16 %v86, %v85
    %v101 = vpack.c.b16 %v88, %v87
    %v102 = vpack.c.b16 %v90, %v89
    %v103 = vpack.c.b16 %v92, %v91
    %v104 = vpack.c.b16 %v94, %v93
    %v105 = vpack.c.b16 %v96, %v95
    %v106 = vpack.c.b16 %v98, %v97
    %115 = vmatprep.subr.bf16.mxu0 0
    %116 = vmatpush1.bf16.msra.mxu0 %v106
    %117 = vmatprep.subr.bf16.mxu0 0
    %118 = vmatpush1.bf16.msra.mxu0 %v105
    %119 = vmatprep.subr.bf16.mxu0 0
    %120 = vmatpush1.bf16.msra.mxu0 %v104
    %121 = vmatprep.subr.bf16.mxu0 0
    %122 = vmatpush1.bf16.msra.mxu0 %v103
    %123 = vmatprep.subr.bf16.mxu0 0
    %124 = vmatpush1.bf16.msra.mxu0 %v102
    %125 = vmatprep.subr.bf16.mxu0 0
    %126 = vmatpush1.bf16.msra.mxu0 %v101
    %127 = vmatprep.subr.bf16.mxu0 0
    %128 = vmatpush1.bf16.msra.mxu0 %v100
    %129 = vmatprep.subr.bf16.mxu0 0
    %130 = vmatpush1.bf16.msra.mxu0 %v99
    %131 = vmatprep.subr.bf16.mxu0 0
    %132 = vmatpush2.bf16.msra.mxu0 0
    %133 = vmatprep.subr.bf16.mxu0 0
    %134 = vmatpush2.bf16.msra.mxu0 0
    %135 = vmatprep.subr.bf16.mxu0 0
    %136 = vmatpush2.bf16.msra.mxu0 0
    %137 = vmatprep.subr.bf16.mxu0 0
    %138 = vmatpush2.bf16.msra.mxu0 0
    %139 = vmatprep.subr.bf16.mxu0 0
    %140 = vmatpush2.bf16.msra.mxu0 0
    %141 = vmatprep.subr.bf16.mxu0 0
    %142 = vmatpush2.bf16.msra.mxu0 0
    %143 = vmatprep.subr.bf16.mxu0 0
    %144 = vmatpush2.bf16.msra.mxu0 0
    %145 = vmatprep.subr.bf16.mxu0 0
    %146 = vmatpush2.bf16.msra.mxu0 0
    %147 = vmatprep.mubr.bf16.mxu0 0
    %148 = vmatmul.mubr.bf16.gmra.mxu0 %v66
    %v149 = vpop.f32.mrf.mxu0
    %v150 = vadd.f32 0.0, %v149
    %v151 = vpop.f32.mrf.mxu0
    %v152 = vpop.f32.mrf.mxu0
    %v153 = vpop.f32.mrf.mxu0
    %154 = vdwg.mxu0
    %155 = vmatprep.subr.bf16.mxu0 0
    %156 = vmatpush1.bf16.msra.mxu0 %v106
    %157 = vmatprep.subr.bf16.mxu0 0
    %158 = vmatpush1.bf16.msra.mxu0 %v105
    %159 = vmatprep.subr.bf16.mxu0 0
    %160 = vmatpush1.bf16.msra.mxu0 %v104
    %161 = vmatprep.subr.bf16.mxu0 0
    %162 = vmatpush1.bf16.msra.mxu0 %v103
    %163 = vmatprep.subr.bf16.mxu0 0
    %164 = vmatpush1.bf16.msra.mxu0 %v102
    %165 = vmatprep.subr.bf16.mxu0 0
    %166 = vmatpush1.bf16.msra.mxu0 %v101
    %167 = vmatprep.subr.bf16.mxu0 0
    %168 = vmatpush1.bf16.msra.mxu0 %v100
    %169 = vmatprep.subr.bf16.mxu0 0
    %170 = vmatpush1.bf16.msra.mxu0 %v99
    %171 = vmatprep.subr.bf16.mxu0 0
    %172 = vmatpush2.bf16.msra.mxu0 0
    %173 = vmatprep.subr.bf16.mxu0 0
    %174 = vmatpush2.bf16.msra.mxu0 0
    %175 = vmatprep.subr.bf16.mxu0 0
    %176 = vmatpush2.bf16.msra.mxu0 0
    %177 = vmatprep.subr.bf16.mxu0 0
    %178 = vmatpush2.bf16.msra.mxu0 0
    %179 = vmatprep.subr.bf16.mxu0 0
    %180 = vmatpush2.bf16.msra.mxu0 0
    %181 = vmatprep.subr.bf16.mxu0 0
    %182 = vmatpush2.bf16.msra.mxu0 0
    %183 = vmatprep.subr.bf16.mxu0 0
    %184 = vmatpush2.bf16.msra.mxu0 0
    %185 = vmatprep.subr.bf16.mxu0 0
    %186 = vmatpush2.bf16.msra.mxu0 0
    %187 = vmatprep.mubr.bf16.mxu0 0
    %188 = vmatmul.mubr.bf16.gmra.mxu0 %v63
    %v189 = vpop.f32.mrf.mxu0
    %v190 = vadd.f32 %v150, %v189
    %v191 = vpop.f32.mrf.mxu0
    %v192 = vpop.f32.mrf.mxu0
    %v193 = vpop.f32.mrf.mxu0
    %194 = vdwg.mxu0
    %v195 = vmul.f32 %v190, 0.03125
    %v196 = vsub.f32 %v45, %v195
    %v197 = vmul.f32 %v196, %v196
    %v198 = vpack.c.bf16 %v197, %v197
    %v199 = vunpack.c.l.bf16 %v198
    %v200 = vsub.f32 %v197, %v199
    %v201 = vpack.c.bf16 %v200, %v200
    %202 = vmatprep.subr.bf16.mxu0 0
    %203 = vmatpush1.bf16.msra.mxu0 %v106
    %204 = vmatprep.subr.bf16.mxu0 0
    %205 = vmatpush1.bf16.msra.mxu0 %v105
    %206 = vmatprep.subr.bf16.mxu0 0
    %207 = vmatpush1.bf16.msra.mxu0 %v104
    %208 = vmatprep.subr.bf16.mxu0 0
    %209 = vmatpush1.bf16.msra.mxu0 %v103
    %210 = vmatprep.subr.bf16.mxu0 0
    %211 = vmatpush1.bf16.msra.mxu0 %v102
    %212 = vmatprep.subr.bf16.mxu0 0
    %213 = vmatpush1.bf16.msra.mxu0 %v101
    %214 = vmatprep.subr.bf16.mxu0 0
    %215 = vmatpush1.bf16.msra.mxu0 %v100
    %216 = vmatprep.subr.bf16.mxu0 0
    %217 = vmatpush1.bf16.msra.mxu0 %v99
    %218 = vmatprep.subr.bf16.mxu0 0
    %219 = vmatpush2.bf16.msra.mxu0 0
    %220 = vmatprep.subr.bf16.mxu0 0
    %221 = vmatpush2.bf16.msra.mxu0 0
    %222 = vmatprep.subr.bf16.mxu0 0
    %223 = vmatpush2.bf16.msra.mxu0 0
    %224 = vmatprep.subr.bf16.mxu0 0
    %225 = vmatpush2.bf16.msra.mxu0 0
    %226 = vmatprep.subr.bf16.mxu0 0
    %227 = vmatpush2.bf16.msra.mxu0 0
    %228 = vmatprep.subr.bf16.mxu0 0
    %229 = vmatpush2.bf16.msra.mxu0 0
    %230 = vmatprep.subr.bf16.mxu0 0
    %231 = vmatpush2.bf16.msra.mxu0 0
    %232 = vmatprep.subr.bf16.mxu0 0
    %233 = vmatpush2.bf16.msra.mxu0 0
    %234 = vmatprep.mubr.bf16.mxu0 0
    %235 = vmatmul.mubr.bf16.gmra.mxu0 %v201
    %v236 = vpop.f32.mrf.mxu0
    %v237 = vadd.f32 0.0, %v236
    %v238 = vpop.f32.mrf.mxu0
    %v239 = vpop.f32.mrf.mxu0
    %v240 = vpop.f32.mrf.mxu0
    %241 = vdwg.mxu0
    %242 = vmatprep.subr.bf16.mxu0 0
    %243 = vmatpush1.bf16.msra.mxu0 %v106
    %244 = vmatprep.subr.bf16.mxu0 0
    %245 = vmatpush1.bf16.msra.mxu0 %v105
    %246 = vmatprep.subr.bf16.mxu0 0
    %247 = vmatpush1.bf16.msra.mxu0 %v104
    %248 = vmatprep.subr.bf16.mxu0 0
    %249 = vmatpush1.bf16.msra.mxu0 %v103
    %250 = vmatprep.subr.bf16.mxu0 0
    %251 = vmatpush1.bf16.msra.mxu0 %v102
    %252 = vmatprep.subr.bf16.mxu0 0
    %253 = vmatpush1.bf16.msra.mxu0 %v101
    %254 = vmatprep.subr.bf16.mxu0 0
    %255 = vmatpush1.bf16.msra.mxu0 %v100
    %256 = vmatprep.subr.bf16.mxu0 0
    %257 = vmatpush1.bf16.msra.mxu0 %v99
    %258 = vmatprep.subr.bf16.mxu0 0
    %259 = vmatpush2.bf16.msra.mxu0 0
    %260 = vmatprep.subr.bf16.mxu0 0
    %261 = vmatpush2.bf16.msra.mxu0 0
    %262 = vmatprep.subr.bf16.mxu0 0
    %263 = vmatpush2.bf16.msra.mxu0 0
    %264 = vmatprep.subr.bf16.mxu0 0
    %265 = vmatpush2.bf16.msra.mxu0 0
    %266 = vmatprep.subr.bf16.mxu0 0
    %267 = vmatpush2.bf16.msra.mxu0 0
    %268 = vmatprep.subr.bf16.mxu0 0
    %269 = vmatpush2.bf16.msra.mxu0 0
    %270 = vmatprep.subr.bf16.mxu0 0
    %271 = vmatpush2.bf16.msra.mxu0 0
    %272 = vmatprep.subr.bf16.mxu0 0
    %273 = vmatpush2.bf16.msra.mxu0 0
    %274 = vmatprep.mubr.bf16.mxu0 0
    %275 = vmatmul.mubr.bf16.gmra.mxu0 %v198
    %v276 = vpop.f32.mrf.mxu0
    %v277 = vadd.f32 %v237, %v276
    %v278 = vpop.f32.mrf.mxu0
    %v279 = vpop.f32.mrf.mxu0
    %v280 = vpop.f32.mrf.mxu0
    %281 = vdwg.mxu0
    %v282 = vmul.f32 %v277, 0.03125
    %v283 = vadd.f32 %v282, 1e-05
    %v284 = vrsqrt.pop %v283
    %v286 = vlaneseq
    %v287 = vshrl.u32 %v286, 7
    %v288 = vsub.s32 0, %v287
    %v289 = vrot.slane %v46, %v288
    %v291 = vmul.f32 %v284, %v289
    %v292 = vmul.f32 %v196, %v291
    %v293 = vld [vmem:[%s3] sm:$0x1]
    %v295 = vlaneseq
    %v296 = vshrl.u32 %v295, 7
    %v297 = vsub.s32 0, %v296
    %v298 = vrot.slane %v293, %v297
    %v300 = vadd.f32 %v292, %v298
    %301 = vst [vmem:[#allocation7] sm:$0xf] %v300
    // Predicated region
    $region26: #{tpu_custom_call.1} parent=1 // pred_check
      _
    $region27: #{tpu_custom_call.1} parent=1 // pred_check_branch
      %303 = sbr.rel (0) target = $region29
    $region28: #{tpu_custom_call.1} parent=1 // pred_region
      %s305 = ssub.s32 64, 64
      %306 = vsyncadd [#allocation4], %s305
      %s308 = sshll.u32 [#allocation7], 4
      %s309 = int_to_ptr.vmem [resolvable:$true] %s308
      %311 = dma.vmem_to_hbm [thread:$0]  %s309, 64, %s4, [#allocation4]
    $region29: #{tpu_custom_call.1} parent=1 // pred_fallthru
      _
    // Predicated region
    $region30: #{tpu_custom_call.1} parent=1 // pred_check
      _
    $region31: #{tpu_custom_call.1} parent=1 // pred_check_branch
      %313 = sbr.rel (0) target = $region33
    $region32: #{tpu_custom_call.1} parent=1 // pred_region
      %314 = dma.done [#allocation4], 64
    $region33: #{tpu_custom_call.1} parent=1 // pred_fallthru
      _
    %315 = vsyncpa [#allocation3], 1
    %316 = vsyncpa [#allocation6], 1
    %317 = vsyncpa [#allocation4], 1

</llo_original>
